<compile_context>
chip_gen: v6e
topology: v6e:2x2x1
jax: 0.10.0
libtpu: 0.0.40
codegen_flags: <defaults>
</compile_context>

<pallas_src>
import functools

import jax
import jax.numpy as jnp
from jax.experimental import pallas as pl
from jax.experimental.pallas import tpu as pltpu

_SUBLANE = 8
_LANE = 128
_LANE_CHOICES = (1024, 512, 256, 128)        # widest lane-dense slab first
_DEFAULT_BLOCK_BYTES = 4 * 1024 * 1024       # ~4 MiB of input per grid step
_MIN_BYTES_FOR_FORCED_SPLIT = 1 * 1024 * 1024  # below this, don't force steps


@functools.lru_cache(maxsize=None)
def _tensorcores_per_chip() -> int:
    """Best-effort TensorCore-per-chip count (2 on v7x, 1 on v5e/v6e)."""
    try:
        info = pltpu.get_tpu_info()
    except Exception:
        return 1
    for attr in ("num_cores", "tensorcores_per_chip", "tensor_cores_per_chip",
                 "num_tensorcores", "cores_per_chip", "core_count"):
        n = getattr(info, attr, None)
        if isinstance(n, int) and n > 0:
            return n
    return 1


def _make_softshrink_kernel(lambd: float):
    lambd = float(lambd)

    def kernel(x_ref, o_ref):
        x = x_ref[...]
        # Native-dtype compute (lambd is a weakly-typed Python float so no
        # upcast happens):  softshrink(x) = x - clip(x, -lambd, lambd).
        o_ref[...] = (x - jnp.clip(x, -lambd, lambd)).astype(o_ref.dtype)

    return kernel


def _softshrink_2d(x2d: jax.Array, lambd: float, *,
                   block_bytes: int = _DEFAULT_BLOCK_BYTES,
                   donate: bool = False) -> jax.Array:
    """Run the kernel on a (rows, lane) slab where lane % 128 == 0."""
    rows, lane = x2d.shape
    dtype = x2d.dtype
    itemsize = jnp.dtype(dtype).itemsize
    in_bytes = rows * lane * itemsize

    if rows <= _SUBLANE:
        # Tiny slab: a single full-array block (block_shape == array dims is
        # always legal, regardless of (8,128) divisibility).
        tile_rows = rows
        grid = (1,)
    else:
        # ~block_bytes of input per grid step (multiple of 8 sublanes).  No
        # f32 upcast in the kernel, so itemsize is the true VMEM footprint.
        target_rows = max(_SUBLANE,
                          (block_bytes // (lane * itemsize)) // _SUBLANE * _SUBLANE)

        # Chip-aware minimum step count for pipeline overlap.
        if in_bytes < _MIN_BYTES_FOR_FORCED_SPLIT:
            min_steps = 1                       # overhead-dominated; don't split
        elif _tensorcores_per_chip() > 1:
            min_steps = 2 * _tensorcores_per_chip()  # >= 2 steps per TC (v7x)
        else:
            min_steps = 3                       # read/compute/write overlap

        max_steps = pl.cdiv(rows, _SUBLANE)
        steps = min(max(min_steps, pl.cdiv(rows, target_rows)), max_steps)

        # Balanced, 8-aligned tile; never larger than the array itself.
        tile_rows = pl.cdiv(pl.cdiv(rows, steps), _SUBLANE) * _SUBLANE
        tile_rows = min(tile_rows, (rows // _SUBLANE) * _SUBLANE)
        grid = (pl.cdiv(rows, tile_rows),)      # last block clamped if partial

    return pl.pallas_call(
        _make_softshrink_kernel(lambd),
        out_shape=jax.ShapeDtypeStruct((rows, lane), dtype),
        grid=grid,
        in_specs=[pl.BlockSpec((tile_rows, lane), lambda i: (i, 0))],
        out_specs=pl.BlockSpec((tile_rows, lane), lambda i: (i, 0)),
        input_output_aliases=({0: 0} if donate else {}),
        compiler_params=pltpu.CompilerParams(
            dimension_semantics=("parallel",),
        ),
    )(x2d)


def _softshrink_lane_dense(x: jax.Array, total: int, lambd: float,
                           donate: bool) -> jax.Array:
    """Reshape (free) into the widest lane-dense slab and run the kernel."""
    for lane in _LANE_CHOICES:
        if total % lane == 0:
            return _softshrink_2d(x.reshape(total // lane, lane), lambd,
                                  donate=donate)
    raise AssertionError("caller must guarantee total % 128 == 0")


def mps_softshrink(x: jax.Array, lambd: float = 0.5, *,
                   donate: bool = False) -> jax.Array:
    """Elementwise softshrink via a Pallas TPU kernel. Works on any shape."""
    orig_shape = x.shape
    total = x.size
    if total == 0:
        return x

    if total % _LANE == 0:
        # Fast path: pure reshape in / reshape out — one HBM read + one write.
        return _softshrink_lane_dense(x, total, lambd, donate).reshape(orig_shape)

    # Ragged path (total not a multiple of 128): run the kernel on the largest
    # 128-aligned prefix and handle the <128-element tail in plain XLA.  This
    # removes the old full-array jnp.pad + trailing-slice round trips.
    # TODO(synk): fold the tail into the kernel via a masked store (scalar-
    # prefetched length) so the ragged path is also a single read+write.
    flat = x.reshape(-1)
    prefix = (total // _LANE) * _LANE
    tail = flat[prefix:]
    tail_out = tail - jnp.clip(tail, -lambd, lambd)
    if prefix == 0:
        return tail_out.reshape(orig_shape)
    head_out = _softshrink_lane_dense(flat[:prefix], prefix, lambd,
                                      donate).reshape(-1)
    return jnp.concatenate([head_out, tail_out]).reshape(orig_shape)


def _reference_softshrink(x, lambd=0.5):
    return jnp.where(x > lambd, x - lambd,
                     jnp.where(x < -lambd, x + lambd, jnp.zeros_like(x)))


if __name__ == "__main__":
    key = jax.random.PRNGKey(0)
    x = jax.random.normal(key, (2, 4, 16, 16), dtype=jnp.float32)

    lambd = 0.5
    y = jax.block_until_ready(mps_softshrink(x, lambd))

    y_ref = _reference_softshrink(x, lambd)
    assert y.shape == x.shape and y.dtype == x.dtype
    assert jnp.allclose(y, y_ref, atol=1e-6), "mismatch vs reference"

    print("KERNEL_OK")
</pallas_src>

<mosaic_0001>
module attributes {stable_mosaic.version = 11 : i64} {
  func.func @kernel(%arg0: i32, %arg1: memref<2x1024xf32, #tpu.memory_space<vmem>>, %arg2: memref<2x1024xf32, #tpu.memory_space<vmem>>) attributes {dimension_semantics = [#tpu.dimension_semantics<parallel>], iteration_bounds = array<i64: 1>, scalar_prefetch = 0 : i64, scratch_operands = 0 : i64, tpu.core_type = #tpu.core_type<tc>, window_params = [{transform_indices = @transform_0, window_bounds = array<i64: 2, 1024>}, {transform_indices = @transform_1, window_bounds = array<i64: 2, 1024>}]} {
    %c0 = arith.constant 0 : index
    %c0_0 = arith.constant 0 : index
    %0 = vector.load %arg1[%c0, %c0_0] : memref<2x1024xf32, #tpu.memory_space<vmem>>, vector<2x1024xf32>
    %cst = arith.constant -5.000000e-01 : f32
    %cst_1 = arith.constant 5.000000e-01 : f32
    %1 = vector.broadcast %cst : f32 to vector<2x1024xf32>
    %2 = arith.maximumf %1, %0 : vector<2x1024xf32>
    %3 = vector.broadcast %cst_1 : f32 to vector<2x1024xf32>
    %4 = arith.minimumf %3, %2 : vector<2x1024xf32>
    %5 = arith.subf %0, %4 : vector<2x1024xf32>
    %c0_2 = arith.constant 0 : index
    %c0_3 = arith.constant 0 : index
    %6 = vector.load %arg2[%c0_2, %c0_3] : memref<2x1024xf32, #tpu.memory_space<vmem>>, vector<2x1024xf32>
    tpu.vector_store %arg2[%c0_2, %c0_3], %5 {strides = array<i32>} : memref<2x1024xf32, #tpu.memory_space<vmem>>, vector<2x1024xf32>,
    return
  }
  func.func @transform_0(%arg0: i32) -> (i32, i32) {
    %c0_i32 = arith.constant 0 : i32
    %c0_i32_0 = arith.constant 0 : i32
    return %arg0, %c0_i32 : i32, i32
  }
  func.func @transform_1(%arg0: i32) -> (i32, i32) {
    %c0_i32 = arith.constant 0 : i32
    %c0_i32_0 = arith.constant 0 : i32
    return %arg0, %c0_i32 : i32, i32
  }
}

</mosaic_0001>

<llo_original>
// kernel: tpu_custom_call.1
$region0: #{tpu_custom_call.1}
  #allocation0 [shape = 'u32[]', space=smem, size = 0x4, offset = 0x4, fixed_abs, tag = 'smem constant byte address 0x4 - core index']
  #allocation1 [shape = 'u32[144,128]{1,0:T(1,128)}', space=vmem, size = 0x12000, scoped, tag = 'internal scratch']
  %s0 = inlined_call_operand.hbm [shape: f32[2,1024], index: 0, kind: input, shape index: {}]
  %s1 = inlined_call_operand.hbm [shape: f32[2,1024], index: 1, kind: output, shape index: {}]
  %s2 = sld [smem:[#allocation0]]
  $region18: #{tpu_custom_call.1} parent=0
    _
  %s4 = ssub.s32 1, %s2
  %s5 = scalar_select 0, %s4, %s2
  $region1: #{tpu_custom_call.1} parent=0
    #allocation2 [shape = 'u8[8192]{0}', space=vmem, size = 0x2000, scoped, tag = 'input window, operand 0, single buffered']
    #allocation3 [shape = 's32[1]{0}', space=sflag, size = 0x4, scoped, tag = 'scoped memory for tpu_custom_call.1']
    #allocation4 [shape = 's32[1]{0}', space=sflag, size = 0x4, scoped, tag = 'scoped memory for tpu_custom_call.1']
    #allocation5 [shape = 'u8[8192]{0}', space=vmem, size = 0x2000, scoped, tag = 'output window, operand 0, single buffered']
    %6 = vsyncpa [#allocation3], 0
    %7 = vsyncpa [#allocation4], 0
    // Predicated region
    $region2: #{tpu_custom_call.1} parent=1 // pred_check
      _
    $region3: #{tpu_custom_call.1} parent=1 // pred_check_branch
      %9 = sbr.rel (0) target = $region5
    $region4: #{tpu_custom_call.1} parent=1 // pred_region
      %s11 = ssub.s32 256, 256
      %12 = vsyncadd [#allocation3], %s11
      %s14 = sshll.u32 [#allocation2], 4
      %s15 = int_to_ptr.vmem [resolvable:$true] %s14
      %17 = dma.hbm_to_vmem [thread:$0]  %s0, 256, %s15, [#allocation3]
    $region5: #{tpu_custom_call.1} parent=1 // pred_fallthru
      _
    // Predicated region
    $region6: #{tpu_custom_call.1} parent=1 // pred_check
      _
    $region7: #{tpu_custom_call.1} parent=1 // pred_check_branch
      %19 = sbr.rel (0) target = $region9
    $region8: #{tpu_custom_call.1} parent=1 // pred_region
      %20 = dma.done [#allocation3], 256
    $region9: #{tpu_custom_call.1} parent=1 // pred_fallthru
      _
    %v21 = vld [vmem:[#allocation2] sm:$0xff]
    %v22 = vld [vmem:[#allocation2 + $0x8] sm:$0xff]
    %v23 = vmax.f32 %v21, -0.5
    %v24 = vmax.f32 %v22, -0.5
    %v25 = vmin.f32 %v23, 0.5
    %v26 = vmin.f32 %v24, 0.5
    %v27 = vsub.f32 %v21, %v25
    %v28 = vsub.f32 %v22, %v26
    %29 = vst [vmem:[#allocation5] sm:$0xff] %v27
    %30 = vst [vmem:[#allocation5 + $0x8] sm:$0xff] %v28
    // Predicated region
    $region10: #{tpu_custom_call.1} parent=1 // pred_check
      _
    $region11: #{tpu_custom_call.1} parent=1 // pred_check_branch
      %32 = sbr.rel (0) target = $region13
    $region12: #{tpu_custom_call.1} parent=1 // pred_region
      %s34 = ssub.s32 256, 256
      %35 = vsyncadd [#allocation4], %s34
      %s37 = sshll.u32 [#allocation5], 4
      %s38 = int_to_ptr.vmem [resolvable:$true] %s37
      %40 = dma.vmem_to_hbm [thread:$0]  %s38, 256, %s1, [#allocation4]
    $region13: #{tpu_custom_call.1} parent=1 // pred_fallthru
      _
    // Predicated region
    $region14: #{tpu_custom_call.1} parent=1 // pred_check
      _
    $region15: #{tpu_custom_call.1} parent=1 // pred_check_branch
      %42 = sbr.rel (0) target = $region17
    $region16: #{tpu_custom_call.1} parent=1 // pred_region
      %43 = dma.done [#allocation4], 256
    $region17: #{tpu_custom_call.1} parent=1 // pred_fallthru
      _
    %44 = vsyncpa [#allocation3], 1
    %45 = vsyncpa [#allocation4], 1

</llo_original>
